<compile_context>
chip_gen: v5e
topology: v5e:2x2
jax: 0.10.0
libtpu: 0.0.40
codegen_flags: <defaults>
</compile_context>

<pallas_src>
import functools

import jax
import jax.numpy as jnp
from jax.experimental import pallas as pl
from jax.experimental.pallas import tpu as pltpu


def _critic_kernel(x_ref, u_ref, wa_ref, wb_ref, wc_ref, q_ref, *,
                   state_dim, action_dim):
    """Fused twin-Q forward. All params packed into 3 weight slabs.

    wa_ref: [D+1, H]  rows 0..sd-1 = state part of (W1|W4),
                      rows sd..D-1 = action part, last row = bias (b1|b4)
    wb_ref: [H+1, H]  block-diagonal (W2, W5), last row = bias (b2|b5)
    wc_ref: [H+1, 2]  col 0 = W3 (upper half), col 1 = W6 (lower half),
                      last row = bias (b3, b6)
    Weight slabs may be bf16; accumulation and all elementwise math is f32.
    """
    sd, ad = state_dim, action_dim
    d = sd + ad

    x = x_ref[...]
    u = u_ref[...]
    wa = wa_ref[...]
    wb = wb_ref[...]
    wc = wc_ref[...]
    hw = wb.shape[1]  # fused hidden width (2 * h_dim)

    # --- layer A (fused l1|l4); split dot replaces concat([x, u]) ---
    h = (jnp.dot(x, wa[:sd, :], preferred_element_type=jnp.float32)
         + jnp.dot(u, wa[sd:d, :], preferred_element_type=jnp.float32)
         + wa[d:d + 1, :].astype(jnp.float32))
    h = jnp.maximum(h, 0.0)

    # --- layer B (block-diagonal fused l2/l5) ---
    h = (jnp.dot(h, wb[:hw, :], preferred_element_type=jnp.float32)
         + wb[hw:hw + 1, :].astype(jnp.float32))
    h = jnp.maximum(h, 0.0)

    # --- layer C (fused l3|l6) -> single lane-dense [B, 2] store ---
    q = (jnp.dot(h, wc[:hw, :], preferred_element_type=jnp.float32)
         + wc[hw:hw + 1, :].astype(jnp.float32))
    q_ref[...] = q.astype(q_ref.dtype)


def critic_forward(x, u, packed_params, *, batch_block=1024,
                   grid_min_batch=8192):
    """x: [B, state_dim], u: [B, action_dim]; returns (q1, q2), each [B, 1].

    Small/typical batches: single VMEM-resident invocation (no grid overhead).
    Very large batches:    batch-blocked cdiv grid, "parallel" for megacore.
    """
    wa, wb, wc = packed_params
    B, sd = x.shape
    ad = u.shape[1]
    d = sd + ad
    H = wb.shape[1]

    kernel = functools.partial(_critic_kernel, state_dim=sd, action_dim=ad)

    def _bytes(a):
        return a.size * a.dtype.itemsize

    flops = 2 * B * (d * H + H * H + H * 2)
    bytes_accessed = (_bytes(x) + _bytes(u) + _bytes(wa) + _bytes(wb)
                      + _bytes(wc) + B * 2 * 4)
    cost = pl.CostEstimate(flops=flops, transcendentals=0,
                           bytes_accessed=bytes_accessed)

    num_blocks = pl.cdiv(B, batch_block)
    if B >= grid_min_batch and num_blocks >= 2:
        # Large-batch path: pipelined batch-blocked grid (ragged tail masked);
        # "parallel" lets v7x shard blocks across its two TensorCores.
        q = pl.pallas_call(
            kernel,
            out_shape=jax.ShapeDtypeStruct((B, 2), jnp.float32),
            grid=(num_blocks,),
            in_specs=[
                pl.BlockSpec((batch_block, sd), lambda i: (i, 0)),
                pl.BlockSpec((batch_block, ad), lambda i: (i, 0)),
                pl.BlockSpec(wa.shape, lambda i: (0, 0)),
                pl.BlockSpec(wb.shape, lambda i: (0, 0)),
                pl.BlockSpec(wc.shape, lambda i: (0, 0)),
            ],
            out_specs=pl.BlockSpec((batch_block, 2), lambda i: (i, 0)),
            compiler_params=pltpu.CompilerParams(
                dimension_semantics=("parallel",)),
            cost_estimate=cost,
        )(x, u, wa, wb, wc)
    else:
        # Default path: one invocation, everything resident in VMEM
        # (weights ~25 KiB, activations < 2 MiB even at B=4096).
        vmem = pl.BlockSpec(memory_space=pltpu.MemorySpace.VMEM)
        q = pl.pallas_call(
            kernel,
            out_shape=jax.ShapeDtypeStruct((B, 2), jnp.float32),
            in_specs=[vmem] * 5,
            out_specs=vmem,
            cost_estimate=cost,
        )(x, u, wa, wb, wc)

    return q[:, 0:1], q[:, 1:2]


def init_critic_params(key, state_dim, action_dim, h_dim=32):
    """Per-layer params mimicking nn.Linear default init.
    Weights stored as [in_features, out_features]; biases as [1, out_features]."""
    d_in = state_dim + action_dim
    dims = [(d_in, h_dim), (h_dim, h_dim), (h_dim, 1),   # l1, l2, l3
            (d_in, h_dim), (h_dim, h_dim), (h_dim, 1)]   # l4, l5, l6
    params = []
    keys = jax.random.split(key, 2 * len(dims))
    for i, (fi, fo) in enumerate(dims):
        bound = 1.0 / (fi ** 0.5)
        w = jax.random.uniform(keys[2 * i], (fi, fo), jnp.float32, -bound, bound)
        b = jax.random.uniform(keys[2 * i + 1], (1, fo), jnp.float32, -bound, bound)
        params.extend([w, b])
    return tuple(params)


def pack_critic_params(params, h_dim=32, dtype=jnp.float32):
    """Pack the 12 per-layer arrays into 3 fused weight slabs (bias = last row).

    dtype=jnp.bfloat16 halves HBM->VMEM bytes for the weights (v6e/v7x);
    the kernel still accumulates and applies bias/ReLU in f32.
    """
    w1, b1, w2, b2, w3, b3, w4, b4, w5, b5, w6, b6 = params
    H = 2 * h_dim

    # Layer A: concat along output dim; bias folded as last row.
    wa = jnp.concatenate([w1, w4], axis=1)                   # [D, H]
    ba = jnp.concatenate([b1, b4], axis=1)                   # [1, H]
    wa_aug = jnp.concatenate([wa, ba], axis=0)               # [D+1, H]

    # Layer B: block-diagonal so the twin branches never mix.
    wb = jnp.zeros((H, H), jnp.float32)
    wb = wb.at[:h_dim, :h_dim].set(w2).at[h_dim:, h_dim:].set(w5)
    bb = jnp.concatenate([b2, b5], axis=1)                   # [1, H]
    wb_aug = jnp.concatenate([wb, bb], axis=0)               # [H+1, H]

    # Layer C: column 0 reads the Q1 half, column 1 reads the Q2 half.
    wc = jnp.zeros((H, 2), jnp.float32)
    wc = wc.at[:h_dim, 0:1].set(w3).at[h_dim:, 1:2].set(w6)
    bc = jnp.concatenate([b3, b6], axis=1)                   # [1, 2]
    wc_aug = jnp.concatenate([wc, bc], axis=0)               # [H+1, 2]

    return (wa_aug.astype(dtype), wb_aug.astype(dtype), wc_aug.astype(dtype))


def critic_reference(x, u, params):
    """Pure-JAX reference using the unfused per-layer params."""
    w1, b1, w2, b2, w3, b3, w4, b4, w5, b5, w6, b6 = params
    xu = jnp.concatenate([x, u], axis=1)
    h = jax.nn.relu(xu @ w1 + b1)
    h = jax.nn.relu(h @ w2 + b2)
    q1 = h @ w3 + b3
    g = jax.nn.relu(xu @ w4 + b4)
    g = jax.nn.relu(g @ w5 + b5)
    q2 = g @ w6 + b6
    return q1, q2


if __name__ == "__main__":
    state_dim, action_dim, h_dim = 12, 4, 32

    key = jax.random.PRNGKey(0)
    k_params, k_x, k_u = jax.random.split(key, 3)

    params = init_critic_params(k_params, state_dim, action_dim, h_dim)
    packed_f32 = pack_critic_params(params, h_dim)

    # --- check 1: small batch, default single-invocation VMEM path (f32) ---
    batch = 8
    x = jax.random.normal(k_x, (batch, state_dim), jnp.float32)
    u = jax.random.normal(k_u, (batch, action_dim), jnp.float32)

    q1, q2 = critic_forward(x, u, packed_f32)
    jax.block_until_ready((q1, q2))
    q1_ref, q2_ref = critic_reference(x, u, params)
    assert q1.shape == (batch, 1) and q2.shape == (batch, 1)
    assert jnp.allclose(q1, q1_ref, atol=2e-5, rtol=1e-5)
    assert jnp.allclose(q2, q2_ref, atol=2e-5, rtol=1e-5)

    # --- check 2: ragged batch on the cdiv-grid path (forced small thresholds
    #     here just to exercise the pipelined/masked-last-block code path) ---
    big = 300
    kx2, ku2 = jax.random.split(jax.random.PRNGKey(1))
    xb = jax.random.normal(kx2, (big, state_dim), jnp.float32)
    ub = jax.random.normal(ku2, (big, action_dim), jnp.float32)
    q1b, q2b = critic_forward(xb, ub, packed_f32,
                              batch_block=128, grid_min_batch=256)
    jax.block_until_ready((q1b, q2b))
    q1b_ref, q2b_ref = critic_reference(xb, ub, params)
    assert q1b.shape == (big, 1) and q2b.shape == (big, 1)
    assert jnp.allclose(q1b, q1b_ref, atol=2e-5, rtol=1e-5)
    assert jnp.allclose(q2b, q2b_ref, atol=2e-5, rtol=1e-5)

    # --- check 3: bf16-packed weights (halved weight bytes), f32 accumulation ---
    params_bf16 = tuple(p.astype(jnp.bfloat16).astype(jnp.float32)
                        for p in params)
    packed_bf16 = pack_critic_params(params_bf16, h_dim, dtype=jnp.bfloat16)
    q1h, q2h = critic_forward(x, u, packed_bf16)
    jax.block_until_ready((q1h, q2h))
    q1h_ref, q2h_ref = critic_reference(x, u, params_bf16)
    assert jnp.allclose(q1h, q1h_ref, atol=1e-4, rtol=1e-4)
    assert jnp.allclose(q2h, q2h_ref, atol=1e-4, rtol=1e-4)

    print("KERNEL_OK")
</pallas_src>

<mosaic_0001>
module attributes {stable_mosaic.version = 11 : i64} {
  func.func @_critic_kernel(%arg0: memref<8x12xf32, #tpu.memory_space<vmem>>, %arg1: memref<8x4xf32, #tpu.memory_space<vmem>>, %arg2: memref<17x64xf32, #tpu.memory_space<vmem>>, %arg3: memref<65x64xf32, #tpu.memory_space<vmem>>, %arg4: memref<65x2xf32, #tpu.memory_space<vmem>>, %arg5: memref<8x2xf32, #tpu.memory_space<vmem>>) attributes {dimension_semantics = [], scalar_prefetch = 0 : i64, scratch_operands = 0 : i64, tpu.core_type = #tpu.core_type<tc>} {
    %c0 = arith.constant 0 : index
    %c0_0 = arith.constant 0 : index
    %0 = vector.load %arg0[%c0, %c0_0] : memref<8x12xf32, #tpu.memory_space<vmem>>, vector<8x12xf32>
    %c0_1 = arith.constant 0 : index
    %c0_2 = arith.constant 0 : index
    %1 = vector.load %arg1[%c0_1, %c0_2] : memref<8x4xf32, #tpu.memory_space<vmem>>, vector<8x4xf32>
    %c0_3 = arith.constant 0 : index
    %c0_4 = arith.constant 0 : index
    %2 = vector.load %arg2[%c0_3, %c0_4] : memref<17x64xf32, #tpu.memory_space<vmem>>, vector<17x64xf32>
    %c0_5 = arith.constant 0 : index
    %c0_6 = arith.constant 0 : index
    %3 = vector.load %arg3[%c0_5, %c0_6] : memref<65x64xf32, #tpu.memory_space<vmem>>, vector<65x64xf32>
    %c0_7 = arith.constant 0 : index
    %c0_8 = arith.constant 0 : index
    %4 = vector.load %arg4[%c0_7, %c0_8] : memref<65x2xf32, #tpu.memory_space<vmem>>, vector<65x2xf32>
    %5 = vector.extract_strided_slice %2 {offsets = [0, 0], sizes = [12, 64], strides = [1, 1]} : vector<17x64xf32> to vector<12x64xf32>
    %cst = arith.constant dense<0.000000e+00> : vector<8x64xf32>
    %6 = tpu.matmul %0, %5, %cst {dimension_numbers = #tpu.dot_dimension_numbers<[1], [0], [0], [1], [0, 0, 1, 1], [], []>} : vector<8x12xf32>, vector<12x64xf32>, vector<8x64xf32> -> vector<8x64xf32>
    %7 = vector.extract_strided_slice %2 {offsets = [12, 0], sizes = [4, 64], strides = [1, 1]} : vector<17x64xf32> to vector<4x64xf32>
    %cst_9 = arith.constant dense<0.000000e+00> : vector<8x64xf32>
    %8 = tpu.matmul %1, %7, %cst_9 {dimension_numbers = #tpu.dot_dimension_numbers<[1], [0], [0], [1], [0, 0, 1, 1], [], []>} : vector<8x4xf32>, vector<4x64xf32>, vector<8x64xf32> -> vector<8x64xf32>
    %9 = arith.addf %6, %8 : vector<8x64xf32>
    %10 = vector.extract_strided_slice %2 {offsets = [16, 0], sizes = [1, 64], strides = [1, 1]} : vector<17x64xf32> to vector<1x64xf32>
    %11 = vector.broadcast %10 : vector<1x64xf32> to vector<8x64xf32>
    %12 = arith.addf %9, %11 : vector<8x64xf32>
    %cst_10 = arith.constant 0.000000e+00 : f32
    %13 = vector.broadcast %cst_10 : f32 to vector<8x64xf32>
    %14 = arith.maximumf %12, %13 : vector<8x64xf32>
    %15 = vector.extract_strided_slice %3 {offsets = [0, 0], sizes = [64, 64], strides = [1, 1]} : vector<65x64xf32> to vector<64x64xf32>
    %cst_11 = arith.constant dense<0.000000e+00> : vector<8x64xf32>
    %16 = tpu.matmul %14, %15, %cst_11 {dimension_numbers = #tpu.dot_dimension_numbers<[1], [0], [0], [1], [0, 0, 1, 1], [], []>} : vector<8x64xf32>, vector<64x64xf32>, vector<8x64xf32> -> vector<8x64xf32>
    %17 = vector.extract_strided_slice %3 {offsets = [64, 0], sizes = [1, 64], strides = [1, 1]} : vector<65x64xf32> to vector<1x64xf32>
    %18 = vector.broadcast %17 : vector<1x64xf32> to vector<8x64xf32>
    %19 = arith.addf %16, %18 : vector<8x64xf32>
    %cst_12 = arith.constant 0.000000e+00 : f32
    %20 = vector.broadcast %cst_12 : f32 to vector<8x64xf32>
    %21 = arith.maximumf %19, %20 : vector<8x64xf32>
    %22 = vector.extract_strided_slice %4 {offsets = [0, 0], sizes = [64, 2], strides = [1, 1]} : vector<65x2xf32> to vector<64x2xf32>
    %cst_13 = arith.constant dense<0.000000e+00> : vector<8x2xf32>
    %23 = tpu.matmul %21, %22, %cst_13 {dimension_numbers = #tpu.dot_dimension_numbers<[1], [0], [0], [1], [0, 0, 1, 1], [], []>} : vector<8x64xf32>, vector<64x2xf32>, vector<8x2xf32> -> vector<8x2xf32>
    %24 = vector.extract_strided_slice %4 {offsets = [64, 0], sizes = [1, 2], strides = [1, 1]} : vector<65x2xf32> to vector<1x2xf32>
    %25 = vector.broadcast %24 : vector<1x2xf32> to vector<8x2xf32>
    %26 = arith.addf %23, %25 : vector<8x2xf32>
    %c0_14 = arith.constant 0 : index
    %c0_15 = arith.constant 0 : index
    %27 = vector.load %arg5[%c0_14, %c0_15] : memref<8x2xf32, #tpu.memory_space<vmem>>, vector<8x2xf32>
    tpu.vector_store %arg5[%c0_14, %c0_15], %26 {strides = array<i32>} : memref<8x2xf32, #tpu.memory_space<vmem>>, vector<8x2xf32>,
    return
  }
}

</mosaic_0001>

<llo_original>
// kernel: tpu_custom_call.1
$region0: #{tpu_custom_call.1}
  #allocation0 [shape = 'u32[]', space=smem, size = 0x4, offset = 0x4, fixed_abs, tag = 'smem constant byte address 0x4 - core index']
  #allocation1 [shape = 'u32[72,128]{1,0:T(1,128)}', space=vmem, size = 0x9000, scoped, tag = 'internal scratch']
  %s0 = inlined_call_operand.vmem [shape: f32[8,12], index: 0, kind: input, shape index: {}]
  %s1 = inlined_call_operand.vmem [shape: f32[8,4], index: 1, kind: input, shape index: {}]
  %s2 = inlined_call_operand.vmem [shape: f32[17,64], index: 2, kind: input, shape index: {}]
  %s3 = inlined_call_operand.vmem [shape: f32[65,64], index: 3, kind: input, shape index: {}]
  %s4 = inlined_call_operand.vmem [shape: f32[65,2], index: 4, kind: input, shape index: {}]
  %s5 = inlined_call_operand.vmem [shape: f32[8,2], index: 5, kind: output, shape index: {}]
  %s6 = sld [smem:[#allocation0]]
  $region30: #{tpu_custom_call.1} parent=0
    _
  %s8 = ssub.s32 1, %s6
  %s9 = scalar_select 0, %s8, %s6
  // Predicated region
  $region2: #{tpu_custom_call.1} parent=0 // pred_check
    _
  $region3: #{tpu_custom_call.1} parent=0 // pred_check_branch
    %11 = sbr.rel (0) target = $region5
  $region4: #{tpu_custom_call.1} parent=0 // pred_region
    _
  $region5: #{tpu_custom_call.1} parent=0 // pred_fallthru
    _
  // Predicated region
  $region6: #{tpu_custom_call.1} parent=0 // pred_check
    _
  $region7: #{tpu_custom_call.1} parent=0 // pred_check_branch
    %13 = sbr.rel (0) target = $region9
  $region8: #{tpu_custom_call.1} parent=0 // pred_region
    _
  $region9: #{tpu_custom_call.1} parent=0 // pred_fallthru
    _
  // Predicated region
  $region10: #{tpu_custom_call.1} parent=0 // pred_check
    _
  $region11: #{tpu_custom_call.1} parent=0 // pred_check_branch
    %15 = sbr.rel (0) target = $region13
  $region12: #{tpu_custom_call.1} parent=0 // pred_region
    _
  $region13: #{tpu_custom_call.1} parent=0 // pred_fallthru
    _
  // Predicated region
  $region14: #{tpu_custom_call.1} parent=0 // pred_check
    _
  $region15: #{tpu_custom_call.1} parent=0 // pred_check_branch
    %17 = sbr.rel (0) target = $region17
  $region16: #{tpu_custom_call.1} parent=0 // pred_region
    _
  $region17: #{tpu_custom_call.1} parent=0 // pred_fallthru
    _
  // Predicated region
  $region18: #{tpu_custom_call.1} parent=0 // pred_check
    _
  $region19: #{tpu_custom_call.1} parent=0 // pred_check_branch
    %19 = sbr.rel (0) target = $region21
  $region20: #{tpu_custom_call.1} parent=0 // pred_region
    _
  $region21: #{tpu_custom_call.1} parent=0 // pred_fallthru
    _
  %v20 = vld [vmem:[%s0] sm:$0xff]
  %v21 = vld [vmem:[%s1] sm:$0xff]
  %v22 = vld [vmem:[%s2] sm:$0xff]
  %v23 = vld [vmem:[%s2 + $0x8] sm:$0xff]
  %v24 = vld [vmem:[%s2 + $0x10] sm:$0x1]
  %v25 = vld [vmem:[%s3] sm:$0xff]
  %v26 = vld [vmem:[%s3 + $0x8] sm:$0xff]
  %v27 = vld [vmem:[%s3 + $0x10] sm:$0xff]
  %v28 = vld [vmem:[%s3 + $0x18] sm:$0xff]
  %v29 = vld [vmem:[%s3 + $0x20] sm:$0xff]
  %v30 = vld [vmem:[%s3 + $0x28] sm:$0xff]
  %v31 = vld [vmem:[%s3 + $0x30] sm:$0xff]
  %v32 = vld [vmem:[%s3 + $0x38] sm:$0xff]
  %v33 = vld [vmem:[%s3 + $0x40] sm:$0x1]
  %v34 = vld [vmem:[%s4] sm:$0xff]
  %v35 = vld [vmem:[%s4 + $0x8] sm:$0xff]
  %v36 = vld [vmem:[%s4 + $0x10] sm:$0xff]
  %v37 = vld [vmem:[%s4 + $0x18] sm:$0xff]
  %v38 = vld [vmem:[%s4 + $0x20] sm:$0xff]
  %v39 = vld [vmem:[%s4 + $0x28] sm:$0xff]
  %v40 = vld [vmem:[%s4 + $0x30] sm:$0xff]
  %v41 = vld [vmem:[%s4 + $0x38] sm:$0xff]
  %v42 = vld [vmem:[%s4 + $0x40] sm:$0x1]
  %v44 = vrot.slane %v23, 4
  %vm45 = vcmask 31744
  %v47 = vsel %vm45, %v21, 0
  %vm49 = vcmask 1043456
  %v50 = vsel %vm49, %v44, 0
  %52 = vmatpush.msra.mxu0 0.0
  %53 = vmatpush.msra.mxu0 0.0
  %54 = vmatpush.msra.mxu0 0.0
  %55 = vmatpush.msra.mxu0 0.0
  %56 = vmatpush.msra.mxu0 0.0
  %57 = vmatpush.msra.mxu0 0.0
  %58 = vmatpush.msra.mxu0 0.0
  %59 = vmatpush.msra.mxu0 0.0
  %60 = vmatpush.msra.mxu0 0.0
  %61 = vmatpush.msra.mxu0 0.0
  %62 = vmatpush.msra.mxu0 0.0
  %63 = vmatpush.msra.mxu0 0.0
  %64 = vmatpush.msra.mxu0 0.0
  %65 = vmatpush.msra.mxu0 0.0
  %66 = vmatpush.msra.mxu0 0.0
  %67 = vmatpush.msra.mxu0 %v50
  %68 = vmatmul.f32.gmra.mxu0 %v47
  %v69 = vpop.f32.mrf.mxu0
  %v70 = vadd.f32 0.0, %v69
  %71 = vdwg.mxu0
  %vm72 = vcmask 97280
  %v74 = vsel %vm72, %v20, 0
  %v76 = vsel %vm49, %v23, 0
  %78 = vmatpush.msra.mxu0 0.0
  %79 = vmatpush.msra.mxu0 0.0
  %80 = vmatpush.msra.mxu0 0.0
  %81 = vmatpush.msra.mxu0 0.0
  %82 = vmatpush.msra.mxu0 0.0
  %83 = vmatpush.msra.mxu0 0.0
  %84 = vmatpush.msra.mxu0 0.0
  %85 = vmatpush.msra.mxu0 0.0
  %86 = vmatpush.msra.mxu0 0.0
  %87 = vmatpush.msra.mxu0 0.0
  %88 = vmatpush.msra.mxu0 0.0
  %89 = vmatpush.msra.mxu0 0.0
  %90 = vmatpush.msra.mxu0 0.0
  %91 = vmatpush.msra.mxu0 0.0
  %92 = vmatpush.msra.mxu0 %v76
  %93 = vmatpush.msra.mxu0 %v22
  %94 = vmatmul.f32.gmra.mxu0 %v74
  %v95 = vpop.f32.mrf.mxu0
  %v96 = vadd.f32 %v70, %v95
  %97 = vdwg.mxu0
  %v98 = vperm.slane %v24, 0
  %v99 = vadd.f32 %v96, %v98
  %v100 = vmax.f32 %v99, 0.0
  %v101 = vperm.slane %v33, 0
  %vm102 = vcmask 523264
  %v104 = vsel %vm102, %v100, 0
  %106 = vmatpush.msra.mxu0 0.0
  %107 = vmatpush.msra.mxu0 0.0
  %108 = vmatpush.msra.mxu0 0.0
  %109 = vmatpush.msra.mxu0 0.0
  %110 = vmatpush.msra.mxu0 0.0
  %111 = vmatpush.msra.mxu0 0.0
  %112 = vmatpush.msra.mxu0 0.0
  %113 = vmatpush.msra.mxu0 0.0
  %114 = vmatpush.msra.mxu0 %v32
  %115 = vmatpush.msra.mxu0 %v31
  %116 = vmatpush.msra.mxu0 %v30
  %117 = vmatpush.msra.mxu0 %v29
  %118 = vmatpush.msra.mxu0 %v28
  %119 = vmatpush.msra.mxu0 %v27
  %120 = vmatpush.msra.mxu0 %v26
  %121 = vmatpush.msra.mxu0 %v25
  %122 = vmatmul.f32.gmra.mxu0 %v104
  %v123 = vpop.f32.mrf.mxu0
  %v124 = vadd.f32 %v101, %v123
  %125 = vdwg.mxu0
  %v126 = vmax.f32 %v124, 0.0
  %v127 = vperm.slane %v42, 0
  %v129 = vsel %vm102, %v126, 0
  %131 = vmatpush.msra.mxu0 0.0
  %132 = vmatpush.msra.mxu0 0.0
  %133 = vmatpush.msra.mxu0 0.0
  %134 = vmatpush.msra.mxu0 0.0
  %135 = vmatpush.msra.mxu0 0.0
  %136 = vmatpush.msra.mxu0 0.0
  %137 = vmatpush.msra.mxu0 0.0
  %138 = vmatpush.msra.mxu0 0.0
  %139 = vmatpush.msra.mxu0 %v41
  %140 = vmatpush.msra.mxu0 %v40
  %141 = vmatpush.msra.mxu0 %v39
  %142 = vmatpush.msra.mxu0 %v38
  %143 = vmatpush.msra.mxu0 %v37
  %144 = vmatpush.msra.mxu0 %v36
  %145 = vmatpush.msra.mxu0 %v35
  %146 = vmatpush.msra.mxu0 %v34
  %147 = vmatmul.f32.gmra.mxu0 %v129
  %v148 = vpop.f32.mrf.mxu0
  %v149 = vadd.f32 %v127, %v148
  %150 = vdwg.mxu0
  %vm151 = vcmask 15360
  %152 = vst.msk [vmem:[%s5] sm:$0xff] %vm151, %v149
  // Predicated region
  $region22: #{tpu_custom_call.1} parent=0 // pred_check
    _
  $region23: #{tpu_custom_call.1} parent=0 // pred_check_branch
    %154 = sbr.rel (0) target = $region25
  $region24: #{tpu_custom_call.1} parent=0 // pred_region
    _
  $region25: #{tpu_custom_call.1} parent=0 // pred_fallthru
    _
  // Predicated region
  $region26: #{tpu_custom_call.1} parent=0 // pred_check
    _
  $region27: #{tpu_custom_call.1} parent=0 // pred_check_branch
    %156 = sbr.rel (0) target = $region29
  $region28: #{tpu_custom_call.1} parent=0 // pred_region
    _
  $region29: #{tpu_custom_call.1} parent=0 // pred_fallthru
    _

</llo_original>
